<compile_context>
chip_gen: v6e
topology: v6e:2x2x1
jax: 0.10.0
libtpu: 0.0.40
codegen_flags: <defaults>
</compile_context>

<pallas_src>
import functools

import jax
import jax.numpy as jnp
from jax.experimental import pallas as pl
from jax.experimental.pallas import tpu as pltpu

_VMEM_LIMIT_BYTES = 32 * 1024 * 1024  # explicit scoped-VMEM budget (portable)


def _round_up(n, m):
    return -(-n // m) * m


def _default_num_blocks():
    """One grid step per TensorCore: 2 on v7x (2 TCs/chip), else 1."""
    try:
        kind = jax.devices()[0].device_kind.lower()
    except Exception:
        return 1
    return 2 if "v7" in kind else 1


def _proj_head_kernel(x_ref, w1_ref, b1_ref, w2_ref, b2_ref, o_ref):
    # In-kernel bf16 cast of the streamed f32 x tile (VPU work hidden under
    # the DMA/MXU; avoids a separate wrapper cast pass over HBM).
    x = x_ref[...].astype(jnp.bfloat16)

    # ---- Linear 1 (BN folded into W1/b1): (bm, in) @ (in, hid) ----
    h = jnp.dot(x, w1_ref[...], preferred_element_type=jnp.float32)
    h = jnp.maximum(h + b1_ref[...], 0.0)          # bias + ReLU in f32

    # ---- Linear 2: (bm, hid) @ (hid, out), bf16 operands / f32 accumulate ----
    y = jnp.dot(h.astype(jnp.bfloat16), w2_ref[...],
                preferred_element_type=jnp.float32)
    y = y + b2_ref[...]

    # ---- Dropout is identity in eval mode; sigmoid; store bf16 ----
    o_ref[...] = jax.nn.sigmoid(y).astype(o_ref.dtype)


@functools.partial(jax.jit, static_argnames=("out_dims", "num_blocks"))
def projection_head_forward(x, w1, b1, w2, b2, *, out_dims, num_blocks=None):
    """x: (B, input_dims) float32 (already flattened: x.view(B, -1)).

    w1: (in, hid_pad) bf16   b1: (1, hid_pad) f32   (BN folded in)
    w2: (hid_pad, out_pad) bf16   b2: (1, out_pad) f32
    Returns (B, out_dims) float32.
    """
    B, in_dims = x.shape
    hid_pad = w1.shape[1]
    out_pad = w2.shape[1]

    if num_blocks is None:
        num_blocks = _default_num_blocks()
    # One block per TensorCore; if B doesn't split into equal 8-row-aligned
    # pieces, collapse to one block so no batch padding is ever needed.
    if num_blocks > 1 and B % (num_blocks * 8) != 0:
        num_blocks = 1
    block_b = B // num_blocks

    # VMEM budget guard: double-buffered x/out tiles + resident weights
    # + f32 intermediate headroom must fit the explicit scoped limit.
    vmem_bytes = (
        2 * (block_b * in_dims * 4 + block_b * out_pad * 2)      # x / out tiles
        + 2 * (in_dims * hid_pad * 2 + hid_pad * 4
               + hid_pad * out_pad * 2 + out_pad * 4)            # weights/biases
        + 4 * block_b * hid_pad                                  # f32 hidden
    )
    if vmem_bytes > _VMEM_LIMIT_BYTES:
        # TODO(synk): for very large input_dims add a trailing "arbitrary" K
        # grid axis with an f32 VMEM accumulator instead of resident W1.
        raise ValueError("ProjectionHead tiles exceed the VMEM budget; "
                         "add a K-split grid axis for this input_dims.")

    cost = pl.CostEstimate(
        flops=2 * B * (in_dims * hid_pad + hid_pad * out_pad),
        transcendentals=B * out_pad,                 # sigmoid ~ one exp each
        bytes_accessed=(B * in_dims * 4              # x (f32, cast in-kernel)
                        + in_dims * hid_pad * 2      # W1 (bf16)
                        + hid_pad * 4                # b1 (f32)
                        + hid_pad * out_pad * 2      # W2 (bf16)
                        + out_pad * 4                # b2 (f32)
                        + B * out_pad * 2),          # output (bf16)
    )

    out = pl.pallas_call(
        _proj_head_kernel,
        out_shape=jax.ShapeDtypeStruct((B, out_pad), jnp.bfloat16),
        grid_spec=pltpu.PrefetchScalarGridSpec(
            num_scalar_prefetch=0,
            grid=(num_blocks,),
            in_specs=[
                pl.BlockSpec((block_b, in_dims), lambda i: (i, 0)),   # x tile (f32)
                pl.BlockSpec((in_dims, hid_pad), lambda i: (0, 0)),   # W1 (resident)
                pl.BlockSpec((1, hid_pad),       lambda i: (0, 0)),   # b1 (resident)
                pl.BlockSpec((hid_pad, out_pad), lambda i: (0, 0)),   # W2 (resident)
                pl.BlockSpec((1, out_pad),       lambda i: (0, 0)),   # b2 (resident)
            ],
            out_specs=pl.BlockSpec((block_b, out_pad), lambda i: (i, 0)),
        ),
        compiler_params=pltpu.CompilerParams(
            dimension_semantics=("parallel",),
            vmem_limit_bytes=_VMEM_LIMIT_BYTES,
        ),
        cost_estimate=cost,
    )(x, w1, b1, w2, b2)

    # Strip zero-padded output columns (they hold sigmoid(0)=0.5) and restore
    # the module's f32 output dtype. Tiny epilogue; no batch slice needed
    # because the batch is never padded.
    return out[:, :out_dims].astype(jnp.float32)


def make_params(key, input_dims, hidden_dims, output_dims, *, lane=128):
    """Deterministic synthetic parameters (shapes match the PyTorch module),
    with BatchNorm folded into Linear-1 and feature dims padded to 128."""
    k1, k2, k3, k4, k5, k6, k7, k8 = jax.random.split(key, 8)

    # nn.Linear(input_dims, hidden_dims): weight (hid, in), bias (hid,)
    w1_t = jax.random.normal(k1, (hidden_dims, input_dims), jnp.float32) * 0.05
    b1 = jax.random.normal(k2, (hidden_dims,), jnp.float32) * 0.05
    # nn.Linear(hidden_dims, output_dims): weight (out, hid), bias (out,)
    w2_t = jax.random.normal(k3, (output_dims, hidden_dims), jnp.float32) * 0.05
    b2 = jax.random.normal(k4, (output_dims,), jnp.float32) * 0.05

    # nn.BatchNorm1d(hidden_dims) parameters + running stats (eval mode).
    gamma = 1.0 + 0.1 * jax.random.normal(k5, (hidden_dims,), jnp.float32)
    beta = 0.1 * jax.random.normal(k6, (hidden_dims,), jnp.float32)
    running_mean = 0.1 * jax.random.normal(k7, (hidden_dims,), jnp.float32)
    running_var = 1.0 + 0.1 * jax.random.uniform(k8, (hidden_dims,), jnp.float32)
    eps = 1e-5

    bn_scale = gamma / jnp.sqrt(running_var + eps)
    bn_shift = beta - running_mean * bn_scale

    # Kernel layout (in, out); fold BN affine into W1/b1 (one-time host fold).
    w1 = w1_t.T * bn_scale[None, :]            # (in, hid)
    b1_eff = b1 * bn_scale + bn_shift          # (hid,)
    w2 = w2_t.T                                # (hid, out)

    # Pad hidden/output feature dims to 128 with zeros (lane-dense tiles).
    hid_pad = _round_up(hidden_dims, lane)
    out_pad = _round_up(output_dims, lane)

    w1_p = jnp.zeros((input_dims, hid_pad), jnp.float32).at[:, :hidden_dims].set(w1)
    b1_p = jnp.zeros((1, hid_pad), jnp.float32).at[:, :hidden_dims].set(b1_eff)
    w2_p = jnp.zeros((hid_pad, out_pad), jnp.float32).at[:hidden_dims, :output_dims].set(w2)
    b2_p = jnp.zeros((1, out_pad), jnp.float32).at[:, :output_dims].set(b2)

    # bf16 matmul operands; biases stay f32.
    return w1_p.astype(jnp.bfloat16), b1_p, w2_p.astype(jnp.bfloat16), b2_p


def reference_forward(x, w1, b1, w2, b2, out_dims):
    """Pure-JAX reference mimicking the kernel's bf16 casts and bf16 output."""
    xb = x.astype(jnp.bfloat16).astype(jnp.float32)
    h = xb @ w1.astype(jnp.float32) + b1
    h = jnp.maximum(h, 0.0)
    hb = h.astype(jnp.bfloat16).astype(jnp.float32)
    y = hb @ w2.astype(jnp.float32) + b2
    s = jax.nn.sigmoid(y).astype(jnp.bfloat16).astype(jnp.float32)
    return s[:, :out_dims]


if __name__ == "__main__":
    # Small shapes: raw input (B, C, T) = (256, 4, 16) -> flattened input_dims = 64.
    # B=256 splits cleanly into 1 block (v5e/v6e) or 2 parallel blocks (v7x).
    B, C, T = 256, 4, 16
    input_dims = C * T          # 64
    hidden_dims = 128           # nn.Module default
    output_dims = 16

    key = jax.random.PRNGKey(0)
    kx, kp = jax.random.split(key)

    x_raw = jax.random.normal(kx, (B, C, T), jnp.float32)
    x = x_raw.reshape(B, -1)    # x.view(B, -1)

    params = make_params(kp, input_dims, hidden_dims, output_dims)

    out = projection_head_forward(x, *params, out_dims=output_dims)
    out = jax.block_until_ready(out)

    ref = reference_forward(x, *params, output_dims)
    assert out.shape == (B, output_dims)
    # bf16 matmuls with f32 accumulation + bf16 output: loose tolerance.
    assert jnp.allclose(out, ref, atol=2e-2, rtol=2e-2), "mismatch vs reference"

    print("KERNEL_OK")
</pallas_src>

<mosaic_0001>
module attributes {stable_mosaic.version = 11 : i64} {
  func.func @_proj_head_kernel(%arg0: i32, %arg1: memref<256x64xf32, #tpu.memory_space<vmem>>, %arg2: memref<64x128xbf16, #tpu.memory_space<vmem>>, %arg3: memref<1x128xf32, #tpu.memory_space<vmem>>, %arg4: memref<128x128xbf16, #tpu.memory_space<vmem>>, %arg5: memref<1x128xf32, #tpu.memory_space<vmem>>, %arg6: memref<256x128xbf16, #tpu.memory_space<vmem>>) attributes {dimension_semantics = [#tpu.dimension_semantics<parallel>], iteration_bounds = array<i64: 1>, scalar_prefetch = 0 : i64, scratch_operands = 0 : i64, tpu.core_type = #tpu.core_type<tc>, window_params = [{transform_indices = @transform_0, window_bounds = array<i64: 256, 64>}, {pipeline_mode = #tpu.pipeline_mode<synchronous>, transform_indices = @transform_1, window_bounds = array<i64: 64, 128>}, {pipeline_mode = #tpu.pipeline_mode<synchronous>, transform_indices = @transform_2, window_bounds = array<i64: 1, 128>}, {pipeline_mode = #tpu.pipeline_mode<synchronous>, transform_indices = @transform_3, window_bounds = array<i64: 128, 128>}, {pipeline_mode = #tpu.pipeline_mode<synchronous>, transform_indices = @transform_4, window_bounds = array<i64: 1, 128>}, {transform_indices = @transform_5, window_bounds = array<i64: 256, 128>}]} {
    %c0 = arith.constant 0 : index
    %c0_0 = arith.constant 0 : index
    %0 = vector.load %arg1[%c0, %c0_0] : memref<256x64xf32, #tpu.memory_space<vmem>>, vector<256x64xf32>
    %1 = arith.truncf %0 : vector<256x64xf32> to vector<256x64xbf16>
    %c0_1 = arith.constant 0 : index
    %c0_2 = arith.constant 0 : index
    %2 = vector.load %arg2[%c0_1, %c0_2] : memref<64x128xbf16, #tpu.memory_space<vmem>>, vector<64x128xbf16>
    %cst = arith.constant dense<0.000000e+00> : vector<256x128xf32>
    %3 = tpu.matmul %1, %2, %cst {dimension_numbers = #tpu.dot_dimension_numbers<[1], [0], [0], [1], [0, 0, 1, 1], [], []>} : vector<256x64xbf16>, vector<64x128xbf16>, vector<256x128xf32> -> vector<256x128xf32>
    %c0_3 = arith.constant 0 : index
    %c0_4 = arith.constant 0 : index
    %4 = vector.load %arg3[%c0_3, %c0_4] : memref<1x128xf32, #tpu.memory_space<vmem>>, vector<1x128xf32>
    %5 = vector.broadcast %4 : vector<1x128xf32> to vector<256x128xf32>
    %6 = arith.addf %3, %5 : vector<256x128xf32>
    %cst_5 = arith.constant 0.000000e+00 : f32
    %7 = vector.broadcast %cst_5 : f32 to vector<256x128xf32>
    %8 = arith.maximumf %6, %7 : vector<256x128xf32>
    %9 = arith.truncf %8 : vector<256x128xf32> to vector<256x128xbf16>
    %c0_6 = arith.constant 0 : index
    %c0_7 = arith.constant 0 : index
    %10 = vector.load %arg4[%c0_6, %c0_7] : memref<128x128xbf16, #tpu.memory_space<vmem>>, vector<128x128xbf16>
    %cst_8 = arith.constant dense<0.000000e+00> : vector<256x128xf32>
    %11 = tpu.matmul %9, %10, %cst_8 {dimension_numbers = #tpu.dot_dimension_numbers<[1], [0], [0], [1], [0, 0, 1, 1], [], []>} : vector<256x128xbf16>, vector<128x128xbf16>, vector<256x128xf32> -> vector<256x128xf32>
    %c0_9 = arith.constant 0 : index
    %c0_10 = arith.constant 0 : index
    %12 = vector.load %arg5[%c0_9, %c0_10] : memref<1x128xf32, #tpu.memory_space<vmem>>, vector<1x128xf32>
    %13 = vector.broadcast %12 : vector<1x128xf32> to vector<256x128xf32>
    %14 = arith.addf %11, %13 : vector<256x128xf32>
    %15 = arith.negf %14 : vector<256x128xf32>
    %16 = math.exp %15 : vector<256x128xf32>
    %cst_11 = arith.constant 1.000000e+00 : f32
    %17 = vector.broadcast %cst_11 : f32 to vector<256x128xf32>
    %18 = arith.addf %17, %16 : vector<256x128xf32>
    %19 = arith.divf %17, %18 : vector<256x128xf32>
    %20 = arith.truncf %19 : vector<256x128xf32> to vector<256x128xbf16>
    %c0_12 = arith.constant 0 : index
    %c0_13 = arith.constant 0 : index
    %21 = vector.load %arg6[%c0_12, %c0_13] : memref<256x128xbf16, #tpu.memory_space<vmem>>, vector<256x128xbf16>
    tpu.vector_store %arg6[%c0_12, %c0_13], %20 {strides = array<i32>} : memref<256x128xbf16, #tpu.memory_space<vmem>>, vector<256x128xbf16>,
    return
  }
  func.func @transform_0(%arg0: i32) -> (i32, i32) {
    %c0_i32 = arith.constant 0 : i32
    %c0_i32_0 = arith.constant 0 : i32
    return %arg0, %c0_i32 : i32, i32
  }
  func.func @transform_1(%arg0: i32) -> (i32, i32) {
    %c0_i32 = arith.constant 0 : i32
    %c0_i32_0 = arith.constant 0 : i32
    %c0_i32_1 = arith.constant 0 : i32
    return %c0_i32, %c0_i32_0 : i32, i32
  }
  func.func @transform_2(%arg0: i32) -> (i32, i32) {
    %c0_i32 = arith.constant 0 : i32
    %c0_i32_0 = arith.constant 0 : i32
    %c0_i32_1 = arith.constant 0 : i32
    return %c0_i32, %c0_i32_0 : i32, i32
  }
  func.func @transform_3(%arg0: i32) -> (i32, i32) {
    %c0_i32 = arith.constant 0 : i32
    %c0_i32_0 = arith.constant 0 : i32
    %c0_i32_1 = arith.constant 0 : i32
    return %c0_i32, %c0_i32_0 : i32, i32
  }
  func.func @transform_4(%arg0: i32) -> (i32, i32) {
    %c0_i32 = arith.constant 0 : i32
    %c0_i32_0 = arith.constant 0 : i32
    %c0_i32_1 = arith.constant 0 : i32
    return %c0_i32, %c0_i32_0 : i32, i32
  }
  func.func @transform_5(%arg0: i32) -> (i32, i32) {
    %c0_i32 = arith.constant 0 : i32
    %c0_i32_0 = arith.constant 0 : i32
    return %arg0, %c0_i32 : i32, i32
  }
}

</mosaic_0001>

<llo_original>
// kernel: projection_head_forward.1
$region0: #{projection_head_forward.1}
  #allocation0 [shape = 'u32[]', space=smem, size = 0x4, offset = 0x4, fixed_abs, tag = 'smem constant byte address 0x4 - core index']
  #allocation1 [shape = 'u32[144,128]{1,0:T(1,128)}', space=vmem, size = 0x12000, scoped, tag = 'internal scratch']
  %s0 = inlined_call_operand.vmem [shape: f32[256,64], index: 0, kind: input, shape index: {}]
  %s1 = inlined_call_operand.vmem [shape: bf16[64,128], index: 1, kind: input, shape index: {}]
  %s2 = inlined_call_operand.vmem [shape: f32[1,128], index: 2, kind: input, shape index: {}]
  %s3 = inlined_call_operand.vmem [shape: bf16[128,128], index: 3, kind: input, shape index: {}]
  %s4 = inlined_call_operand.vmem [shape: f32[1,128], index: 4, kind: input, shape index: {}]
  %s5 = inlined_call_operand.vmem [shape: bf16[256,128], index: 5, kind: output, shape index: {}]
  %s6 = sld [smem:[#allocation0]]
  $region30: #{projection_head_forward.1} parent=0
    _
  %s8 = ssub.s32 1, %s6
  %s9 = scalar_select 0, %s8, %s6
  // Predicated region
  $region2: #{projection_head_forward.1} parent=0 // pred_check
    _
  $region3: #{projection_head_forward.1} parent=0 // pred_check_branch
    %11 = sbr.rel (0) target = $region5
  $region4: #{projection_head_forward.1} parent=0 // pred_region
    _
  $region5: #{projection_head_forward.1} parent=0 // pred_fallthru
    _
  // Predicated region
  $region6: #{projection_head_forward.1} parent=0 // pred_check
    _
  $region7: #{projection_head_forward.1} parent=0 // pred_check_branch
    %13 = sbr.rel (0) target = $region9
  $region8: #{projection_head_forward.1} parent=0 // pred_region
    _
  $region9: #{projection_head_forward.1} parent=0 // pred_fallthru
    _
  // Predicated region
  $region10: #{projection_head_forward.1} parent=0 // pred_check
    _
  $region11: #{projection_head_forward.1} parent=0 // pred_check_branch
    %15 = sbr.rel (0) target = $region13
  $region12: #{projection_head_forward.1} parent=0 // pred_region
    _
  $region13: #{projection_head_forward.1} parent=0 // pred_fallthru
    _
  // Predicated region
  $region14: #{projection_head_forward.1} parent=0 // pred_check
    _
  $region15: #{projection_head_forward.1} parent=0 // pred_check_branch
    %17 = sbr.rel (0) target = $region17
  $region16: #{projection_head_forward.1} parent=0 // pred_region
    _
  $region17: #{projection_head_forward.1} parent=0 // pred_fallthru
    _
  // Predicated region
  $region18: #{projection_head_forward.1} parent=0 // pred_check
    _
  $region19: #{projection_head_forward.1} parent=0 // pred_check_branch
    %19 = sbr.rel (0) target = $region21
  $region20: #{projection_head_forward.1} parent=0 // pred_region
    _
  $region21: #{projection_head_forward.1} parent=0 // pred_fallthru
    _
  %v21 = vld [vmem:[%s0] sm:$0xff]
  %v22 = vld [vmem:[%s0 + $0x8] sm:$0xff]
  %v23 = vld [vmem:[%s0 + $0x10] sm:$0xff]
  %v24 = vld [vmem:[%s0 + $0x18] sm:$0xff]
  %v25 = vld [vmem:[%s0 + $0x20] sm:$0xff]
  %v26 = vld [vmem:[%s0 + $0x28] sm:$0xff]
  %v27 = vld [vmem:[%s0 + $0x30] sm:$0xff]
  %v28 = vld [vmem:[%s0 + $0x38] sm:$0xff]
  %v29 = vld [vmem:[%s0 + $0x40] sm:$0xff]
  %v30 = vld [vmem:[%s0 + $0x48] sm:$0xff]
  %v31 = vld [vmem:[%s0 + $0x50] sm:$0xff]
  %v32 = vld [vmem:[%s0 + $0x58] sm:$0xff]
  %v33 = vld [vmem:[%s0 + $0x60] sm:$0xff]
  %v34 = vld [vmem:[%s0 + $0x68] sm:$0xff]
  %v35 = vld [vmem:[%s0 + $0x70] sm:$0xff]
  %v36 = vld [vmem:[%s0 + $0x78] sm:$0xff]
  %v37 = vld [vmem:[%s0 + $0x80] sm:$0xff]
  %v38 = vld [vmem:[%s0 + $0x88] sm:$0xff]
  %v39 = vld [vmem:[%s0 + $0x90] sm:$0xff]
  %v40 = vld [vmem:[%s0 + $0x98] sm:$0xff]
  %v41 = vld [vmem:[%s0 + $0xa0] sm:$0xff]
  %v42 = vld [vmem:[%s0 + $0xa8] sm:$0xff]
  %v43 = vld [vmem:[%s0 + $0xb0] sm:$0xff]
  %v44 = vld [vmem:[%s0 + $0xb8] sm:$0xff]
  %v45 = vld [vmem:[%s0 + $0xc0] sm:$0xff]
  %v46 = vld [vmem:[%s0 + $0xc8] sm:$0xff]
  %v47 = vld [vmem:[%s0 + $0xd0] sm:$0xff]
  %v48 = vld [vmem:[%s0 + $0xd8] sm:$0xff]
  %v49 = vld [vmem:[%s0 + $0xe0] sm:$0xff]
  %v50 = vld [vmem:[%s0 + $0xe8] sm:$0xff]
  %v51 = vld [vmem:[%s0 + $0xf0] sm:$0xff]
  %v52 = vld [vmem:[%s0 + $0xf8] sm:$0xff]
  %v53 = vpack.c.bf16 %v22, %v21
  %v54 = vpack.c.bf16 %v24, %v23
  %v55 = vpack.c.bf16 %v26, %v25
  %v56 = vpack.c.bf16 %v28, %v27
  %v57 = vpack.c.bf16 %v30, %v29
  %v58 = vpack.c.bf16 %v32, %v31
  %v59 = vpack.c.bf16 %v34, %v33
  %v60 = vpack.c.bf16 %v36, %v35
  %v61 = vpack.c.bf16 %v38, %v37
  %v62 = vpack.c.bf16 %v40, %v39
  %v63 = vpack.c.bf16 %v42, %v41
  %v64 = vpack.c.bf16 %v44, %v43
  %v65 = vpack.c.bf16 %v46, %v45
  %v66 = vpack.c.bf16 %v48, %v47
  %v67 = vpack.c.bf16 %v50, %v49
  %v68 = vpack.c.bf16 %v52, %v51
  %v69 = vld [vmem:[%s1] sm:$0xf]
  %v70 = vld [vmem:[%s1 + $0x4] sm:$0xf]
  %v71 = vld [vmem:[%s1 + $0x8] sm:$0xf]
  %v72 = vld [vmem:[%s1 + $0xc] sm:$0xf]
  %v73 = vld [vmem:[%s1 + $0x10] sm:$0xf]
  %v74 = vld [vmem:[%s1 + $0x14] sm:$0xf]
  %v75 = vld [vmem:[%s1 + $0x18] sm:$0xf]
  %v76 = vld [vmem:[%s1 + $0x1c] sm:$0xf]
  %v77 = vld [vmem:[%s2] sm:$0x1]
  %v79 = vlaneseq
  %v80 = vshrl.u32 %v79, 7
  %v81 = vsub.s32 0, %v80
  %v82 = vrot.slane %v77, %v81
  %v92 = vunpack.c.l.b16 %v69
  %v93 = vunpack.c.l.b16 %v70
  %v94 = vunpack.c.l.b16 %v71
  %v95 = vunpack.c.l.b16 %v72
  %v96 = vunpack.c.l.b16 %v73
  %v97 = vunpack.c.l.b16 %v74
  %v98 = vunpack.c.l.b16 %v75
  %v99 = vunpack.c.l.b16 %v76
  %v100 = vpack.c.b16 %v93, %v92
  %v101 = vpack.c.b16 %v95, %v94
  %v102 = vpack.c.b16 %v97, %v96
  %v103 = vpack.c.b16 %v99, %v98
  %vm108 = vcmask 523264
  %v110 = vsel %vm108, %v53, 0
  %v113 = vsel %vm108, %v54, 0
  %v116 = vsel %vm108, %v55, 0
  %v119 = vsel %vm108, %v56, 0
  %v122 = vsel %vm108, %v57, 0
  %v125 = vsel %vm108, %v58, 0
  %v128 = vsel %vm108, %v59, 0
  %v131 = vsel %vm108, %v60, 0
  %v134 = vsel %vm108, %v61, 0
  %v137 = vsel %vm108, %v62, 0
  %v140 = vsel %vm108, %v63, 0
  %v143 = vsel %vm108, %v64, 0
  %v146 = vsel %vm108, %v65, 0
  %v149 = vsel %vm108, %v66, 0
  %v152 = vsel %vm108, %v67, 0
  %v155 = vsel %vm108, %v68, 0
  %157 = vmatprep.subr.bf16.mxu0 0
  %158 = vmatpush1.bf16.msra.mxu0 0
  %159 = vmatprep.subr.bf16.mxu0 0
  %160 = vmatpush1.bf16.msra.mxu0 0
  %161 = vmatprep.subr.bf16.mxu0 0
  %162 = vmatpush1.bf16.msra.mxu0 0
  %163 = vmatprep.subr.bf16.mxu0 0
  %164 = vmatpush1.bf16.msra.mxu0 0
  %165 = vmatprep.subr.bf16.mxu0 0
  %166 = vmatpush1.bf16.msra.mxu0 %v103
  %167 = vmatprep.subr.bf16.mxu0 0
  %168 = vmatpush1.bf16.msra.mxu0 %v102
  %169 = vmatprep.subr.bf16.mxu0 0
  %170 = vmatpush1.bf16.msra.mxu0 %v101
  %171 = vmatprep.subr.bf16.mxu0 0
  %172 = vmatpush1.bf16.msra.mxu0 %v100
  %173 = vmatprep.subr.bf16.mxu0 0
  %174 = vmatpush2.bf16.msra.mxu0 0
  %175 = vmatprep.subr.bf16.mxu0 0
  %176 = vmatpush2.bf16.msra.mxu0 0
  %177 = vmatprep.subr.bf16.mxu0 0
  %178 = vmatpush2.bf16.msra.mxu0 0
  %179 = vmatprep.subr.bf16.mxu0 0
  %180 = vmatpush2.bf16.msra.mxu0 0
  %181 = vmatprep.subr.bf16.mxu0 0
  %182 = vmatpush2.bf16.msra.mxu0 0
  %183 = vmatprep.subr.bf16.mxu0 0
  %184 = vmatpush2.bf16.msra.mxu0 0
  %185 = vmatprep.subr.bf16.mxu0 0
  %186 = vmatpush2.bf16.msra.mxu0 0
  %187 = vmatprep.subr.bf16.mxu0 0
  %188 = vmatpush2.bf16.msra.mxu0 0
  %189 = vmatprep.mubr.bf16.mxu0 0
  %190 = vmatmul.mubr.bf16.gmra.mxu0 %v110
  %v191 = vpop.f32.mrf.mxu0
  %v192 = vadd.f32 %v82, %v191
  %v193 = vpop.f32.mrf.mxu0
  %v194 = vpop.f32.mrf.mxu0
  %v195 = vadd.f32 %v82, %v194
  %v196 = vpop.f32.mrf.mxu0
  %197 = vmatprep.mubr.bf16.mxu0 0
  %198 = vmatmul.mubr.bf16.gmra.mxu0 %v113
  %v199 = vpop.f32.mrf.mxu0
  %v200 = vadd.f32 %v82, %v199
  %v201 = vpop.f32.mrf.mxu0
  %v202 = vpop.f32.mrf.mxu0
  %v203 = vadd.f32 %v82, %v202
  %v204 = vpop.f32.mrf.mxu0
  %205 = vmatprep.mubr.bf16.mxu0 0
  %206 = vmatmul.mubr.bf16.gmra.mxu0 %v116
  %v207 = vpop.f32.mrf.mxu0
  %v208 = vadd.f32 %v82, %v207
  %v209 = vpop.f32.mrf.mxu0
  %v210 = vpop.f32.mrf.mxu0
  %v211 = vadd.f32 %v82, %v210
  %v212 = vpop.f32.mrf.mxu0
  %213 = vmatprep.mubr.bf16.mxu0 0
  %214 = vmatmul.mubr.bf16.gmra.mxu0 %v119
  %v215 = vpop.f32.mrf.mxu0
  %v216 = vadd.f32 %v82, %v215
  %v217 = vpop.f32.mrf.mxu0
  %v218 = vpop.f32.mrf.mxu0
  %v219 = vadd.f32 %v82, %v218
  %v220 = vpop.f32.mrf.mxu0
  %221 = vmatprep.mubr.bf16.mxu0 0
  %222 = vmatmul.mubr.bf16.gmra.mxu0 %v122
  %v223 = vpop.f32.mrf.mxu0
  %v224 = vadd.f32 %v82, %v223
  %v225 = vpop.f32.mrf.mxu0
  %v226 = vpop.f32.mrf.mxu0
  %v227 = vadd.f32 %v82, %v226
  %v228 = vpop.f32.mrf.mxu0
  %229 = vmatprep.mubr.bf16.mxu0 0
  %230 = vmatmul.mubr.bf16.gmra.mxu0 %v125
  %v231 = vpop.f32.mrf.mxu0
  %v232 = vadd.f32 %v82, %v231
  %v233 = vpop.f32.mrf.mxu0
  %v234 = vpop.f32.mrf.mxu0
  %v235 = vadd.f32 %v82, %v234
  %v236 = vpop.f32.mrf.mxu0
  %237 = vmatprep.mubr.bf16.mxu0 0
  %238 = vmatmul.mubr.bf16.gmra.mxu0 %v128
  %v239 = vpop.f32.mrf.mxu0
  %v240 = vadd.f32 %v82, %v239
  %v241 = vpop.f32.mrf.mxu0
  %v242 = vpop.f32.mrf.mxu0
  %v243 = vadd.f32 %v82, %v242
  %v244 = vpop.f32.mrf.mxu0
  %245 = vmatprep.mubr.bf16.mxu0 0
  %246 = vmatmul.mubr.bf16.gmra.mxu0 %v131
  %v247 = vpop.f32.mrf.mxu0
  %v248 = vadd.f32 %v82, %v247
  %v249 = vpop.f32.mrf.mxu0
  %v250 = vpop.f32.mrf.mxu0
  %v251 = vadd.f32 %v82, %v250
  %v252 = vpop.f32.mrf.mxu0
  %253 = vmatprep.mubr.bf16.mxu0 0
  %254 = vmatmul.mubr.bf16.gmra.mxu0 %v134
  %v255 = vpop.f32.mrf.mxu0
  %v256 = vadd.f32 %v82, %v255
  %v257 = vpop.f32.mrf.mxu0
  %v258 = vpop.f32.mrf.mxu0
  %v259 = vadd.f32 %v82, %v258
  %v260 = vpop.f32.mrf.mxu0
  %261 = vmatprep.mubr.bf16.mxu0 0
  %262 = vmatmul.mubr.bf16.gmra.mxu0 %v137
  %v263 = vpop.f32.mrf.mxu0
  %v264 = vadd.f32 %v82, %v263
  %v265 = vpop.f32.mrf.mxu0
  %v266 = vpop.f32.mrf.mxu0
  %v267 = vadd.f32 %v82, %v266
  %v268 = vpop.f32.mrf.mxu0
  %269 = vmatprep.mubr.bf16.mxu0 0
  %270 = vmatmul.mubr.bf16.gmra.mxu0 %v140
  %v271 = vpop.f32.mrf.mxu0
  %v272 = vadd.f32 %v82, %v271
  %v273 = vpop.f32.mrf.mxu0
  %v274 = vpop.f32.mrf.mxu0
  %v275 = vadd.f32 %v82, %v274
  %v276 = vpop.f32.mrf.mxu0
  %277 = vmatprep.mubr.bf16.mxu0 0
  %278 = vmatmul.mubr.bf16.gmra.mxu0 %v143
  %v279 = vpop.f32.mrf.mxu0
  %v280 = vadd.f32 %v82, %v279
  %v281 = vpop.f32.mrf.mxu0
  %v282 = vpop.f32.mrf.mxu0
  %v283 = vadd.f32 %v82, %v282
  %v284 = vpop.f32.mrf.mxu0
  %285 = vmatprep.mubr.bf16.mxu0 0
  %286 = vmatmul.mubr.bf16.gmra.mxu0 %v146
  %v287 = vpop.f32.mrf.mxu0
  %v288 = vadd.f32 %v82, %v287
  %v289 = vpop.f32.mrf.mxu0
  %v290 = vpop.f32.mrf.mxu0
  %v291 = vadd.f32 %v82, %v290
  %v292 = vpop.f32.mrf.mxu0
  %293 = vmatprep.mubr.bf16.mxu0 0
  %294 = vmatmul.mubr.bf16.gmra.mxu0 %v149
  %v295 = vpop.f32.mrf.mxu0
  %v296 = vadd.f32 %v82, %v295
  %v297 = vpop.f32.mrf.mxu0
  %v298 = vpop.f32.mrf.mxu0
  %v299 = vadd.f32 %v82, %v298
  %v300 = vpop.f32.mrf.mxu0
  %301 = vmatprep.mubr.bf16.mxu0 0
  %302 = vmatmul.mubr.bf16.gmra.mxu0 %v152
  %v303 = vpop.f32.mrf.mxu0
  %v304 = vadd.f32 %v82, %v303
  %v305 = vpop.f32.mrf.mxu0
  %v306 = vpop.f32.mrf.mxu0
  %v307 = vadd.f32 %v82, %v306
  %v308 = vpop.f32.mrf.mxu0
  %309 = vmatprep.mubr.bf16.mxu0 0
  %310 = vmatmul.mubr.bf16.gmra.mxu0 %v155
  %v311 = vpop.f32.mrf.mxu0
  %v312 = vadd.f32 %v82, %v311
  %v313 = vpop.f32.mrf.mxu0
  %v314 = vpop.f32.mrf.mxu0
  %v315 = vadd.f32 %v82, %v314
  %v316 = vpop.f32.mrf.mxu0
  %317 = vdwg.mxu0
  %v318 = vmax.f32 %v192, 0.0
  %v319 = vmax.f32 %v195, 0.0
  %v320 = vmax.f32 %v200, 0.0
  %v321 = vmax.f32 %v203, 0.0
  %v322 = vmax.f32 %v208, 0.0
  %v323 = vmax.f32 %v211, 0.0
  %v324 = vmax.f32 %v216, 0.0
  %v325 = vmax.f32 %v219, 0.0
  %v326 = vmax.f32 %v224, 0.0
  %v327 = vmax.f32 %v227, 0.0
  %v328 = vmax.f32 %v232, 0.0
  %v329 = vmax.f32 %v235, 0.0
  %v330 = vmax.f32 %v240, 0.0
  %v331 = vmax.f32 %v243, 0.0
  %v332 = vmax.f32 %v248, 0.0
  %v333 = vmax.f32 %v251, 0.0
  %v334 = vmax.f32 %v256, 0.0
  %v335 = vmax.f32 %v259, 0.0
  %v336 = vmax.f32 %v264, 0.0
  %v337 = vmax.f32 %v267, 0.0
  %v338 = vmax.f32 %v272, 0.0
  %v339 = vmax.f32 %v275, 0.0
  %v340 = vmax.f32 %v280, 0.0
  %v341 = vmax.f32 %v283, 0.0
  %v342 = vmax.f32 %v288, 0.0
  %v343 = vmax.f32 %v291, 0.0
  %v344 = vmax.f32 %v296, 0.0
  %v345 = vmax.f32 %v299, 0.0
  %v346 = vmax.f32 %v304, 0.0
  %v347 = vmax.f32 %v307, 0.0
  %v348 = vmax.f32 %v312, 0.0
  %v349 = vmax.f32 %v315, 0.0
  %v350 = vpack.c.bf16 %v319, %v318
  %v351 = vpack.c.bf16 %v321, %v320
  %v352 = vpack.c.bf16 %v323, %v322
  %v353 = vpack.c.bf16 %v325, %v324
  %v354 = vpack.c.bf16 %v327, %v326
  %v355 = vpack.c.bf16 %v329, %v328
  %v356 = vpack.c.bf16 %v331, %v330
  %v357 = vpack.c.bf16 %v333, %v332
  %v358 = vpack.c.bf16 %v335, %v334
  %v359 = vpack.c.bf16 %v337, %v336
  %v360 = vpack.c.bf16 %v339, %v338
  %v361 = vpack.c.bf16 %v341, %v340
  %v362 = vpack.c.bf16 %v343, %v342
  %v363 = vpack.c.bf16 %v345, %v344
  %v364 = vpack.c.bf16 %v347, %v346
  %v365 = vpack.c.bf16 %v349, %v348
  %v366 = vld [vmem:[%s3] sm:$0xf]
  %v367 = vld [vmem:[%s3 + $0x4] sm:$0xf]
  %v368 = vld [vmem:[%s3 + $0x8] sm:$0xf]
  %v369 = vld [vmem:[%s3 + $0xc] sm:$0xf]
  %v370 = vld [vmem:[%s3 + $0x10] sm:$0xf]
  %v371 = vld [vmem:[%s3 + $0x14] sm:$0xf]
  %v372 = vld [vmem:[%s3 + $0x18] sm:$0xf]
  %v373 = vld [vmem:[%s3 + $0x1c] sm:$0xf]
  %v374 = vld [vmem:[%s3 + $0x20] sm:$0xf]
  %v375 = vld [vmem:[%s3 + $0x24] sm:$0xf]
  %v376 = vld [vmem:[%s3 + $0x28] sm:$0xf]
  %v377 = vld [vmem:[%s3 + $0x2c] sm:$0xf]
  %v378 = vld [vmem:[%s3 + $0x30] sm:$0xf]
  %v379 = vld [vmem:[%s3 + $0x34] sm:$0xf]
  %v380 = vld [vmem:[%s3 + $0x38] sm:$0xf]
  %v381 = vld [vmem:[%s3 + $0x3c] sm:$0xf]
  %v382 = vld [vmem:[%s4] sm:$0x1]
  %v384 = vlaneseq
  %v385 = vshrl.u32 %v384, 7
  %v386 = vsub.s32 0, %v385
  %v387 = vrot.slane %v382, %v386
  %v405 = vunpack.c.l.b16 %v366
  %v406 = vunpack.c.l.b16 %v367
  %v407 = vunpack.c.l.b16 %v368
  %v408 = vunpack.c.l.b16 %v369
  %v409 = vunpack.c.l.b16 %v370
  %v410 = vunpack.c.l.b16 %v371
  %v411 = vunpack.c.l.b16 %v372
  %v412 = vunpack.c.l.b16 %v373
  %v413 = vunpack.c.l.b16 %v374
  %v414 = vunpack.c.l.b16 %v375
  %v415 = vunpack.c.l.b16 %v376
  %v416 = vunpack.c.l.b16 %v377
  %v417 = vunpack.c.l.b16 %v378
  %v418 = vunpack.c.l.b16 %v379
  %v419 = vunpack.c.l.b16 %v380
  %v420 = vunpack.c.l.b16 %v381
  %v421 = vpack.c.b16 %v406, %v405
  %v422 = vpack.c.b16 %v408, %v407
  %v423 = vpack.c.b16 %v410, %v409
  %v424 = vpack.c.b16 %v412, %v411
  %v425 = vpack.c.b16 %v414, %v413
  %v426 = vpack.c.b16 %v416, %v415
  %v427 = vpack.c.b16 %v418, %v417
  %v428 = vpack.c.b16 %v420, %v419
  %437 = vmatprep.subr.bf16.mxu0 0
  %438 = vmatpush1.bf16.msra.mxu0 %v428
  %439 = vmatprep.subr.bf16.mxu0 0
  %440 = vmatpush1.bf16.msra.mxu0 %v427
  %441 = vmatprep.subr.bf16.mxu0 0
  %442 = vmatpush1.bf16.msra.mxu0 %v426
  %443 = vmatprep.subr.bf16.mxu0 0
  %444 = vmatpush1.bf16.msra.mxu0 %v425
  %445 = vmatprep.subr.bf16.mxu0 0
  %446 = vmatpush1.bf16.msra.mxu0 %v424
  %447 = vmatprep.subr.bf16.mxu0 0
  %448 = vmatpush1.bf16.msra.mxu0 %v423
  %449 = vmatprep.subr.bf16.mxu0 0
  %450 = vmatpush1.bf16.msra.mxu0 %v422
  %451 = vmatprep.subr.bf16.mxu0 0
  %452 = vmatpush1.bf16.msra.mxu0 %v421
  %453 = vmatprep.subr.bf16.mxu0 0
  %454 = vmatpush2.bf16.msra.mxu0 0
  %455 = vmatprep.subr.bf16.mxu0 0
  %456 = vmatpush2.bf16.msra.mxu0 0
  %457 = vmatprep.subr.bf16.mxu0 0
  %458 = vmatpush2.bf16.msra.mxu0 0
  %459 = vmatprep.subr.bf16.mxu0 0
  %460 = vmatpush2.bf16.msra.mxu0 0
  %461 = vmatprep.subr.bf16.mxu0 0
  %462 = vmatpush2.bf16.msra.mxu0 0
  %463 = vmatprep.subr.bf16.mxu0 0
  %464 = vmatpush2.bf16.msra.mxu0 0
  %465 = vmatprep.subr.bf16.mxu0 0
  %466 = vmatpush2.bf16.msra.mxu0 0
  %467 = vmatprep.subr.bf16.mxu0 0
  %468 = vmatpush2.bf16.msra.mxu0 0
  %469 = vmatprep.mubr.bf16.mxu0 0
  %470 = vmatmul.mubr.bf16.gmra.mxu0 %v350
  %v471 = vpop.f32.mrf.mxu0
  %v472 = vadd.f32 %v387, %v471
  %v473 = vpop.f32.mrf.mxu0
  %v474 = vpop.f32.mrf.mxu0
  %v475 = vadd.f32 %v387, %v474
  %v476 = vpop.f32.mrf.mxu0
  %477 = vmatprep.mubr.bf16.mxu0 0
  %478 = vmatmul.mubr.bf16.gmra.mxu0 %v351
  %v479 = vpop.f32.mrf.mxu0
  %v480 = vadd.f32 %v387, %v479
  %v481 = vpop.f32.mrf.mxu0
  %v482 = vpop.f32.mrf.mxu0
  %v483 = vadd.f32 %v387, %v482
  %v484 = vpop.f32.mrf.mxu0
  %485 = vmatprep.mubr.bf16.mxu0 0
  %486 = vmatmul.mubr.bf16.gmra.mxu0 %v352
  %v487 = vpop.f32.mrf.mxu0
  %v488 = vadd.f32 %v387, %v487
  %v489 = vpop.f32.mrf.mxu0
  %v490 = vpop.f32.mrf.mxu0
  %v491 = vadd.f32 %v387, %v490
  %v492 = vpop.f32.mrf.mxu0
  %493 = vmatprep.mubr.bf16.mxu0 0
  %494 = vmatmul.mubr.bf16.gmra.mxu0 %v353
  %v495 = vpop.f32.mrf.mxu0
  %v496 = vadd.f32 %v387, %v495
  %v497 = vpop.f32.mrf.mxu0
  %v498 = vpop.f32.mrf.mxu0
  %v499 = vadd.f32 %v387, %v498
  %v500 = vpop.f32.mrf.mxu0
  %501 = vmatprep.mubr.bf16.mxu0 0
  %502 = vmatmul.mubr.bf16.gmra.mxu0 %v354
  %v503 = vpop.f32.mrf.mxu0
  %v504 = vadd.f32 %v387, %v503
  %v505 = vpop.f32.mrf.mxu0
  %v506 = vpop.f32.mrf.mxu0
  %v507 = vadd.f32 %v387, %v506
  %v508 = vpop.f32.mrf.mxu0
  %509 = vmatprep.mubr.bf16.mxu0 0
  %510 = vmatmul.mubr.bf16.gmra.mxu0 %v355
  %v511 = vpop.f32.mrf.mxu0
  %v512 = vadd.f32 %v387, %v511
  %v513 = vpop.f32.mrf.mxu0
  %v514 = vpop.f32.mrf.mxu0
  %v515 = vadd.f32 %v387, %v514
  %v516 = vpop.f32.mrf.mxu0
  %517 = vmatprep.mubr.bf16.mxu0 0
  %518 = vmatmul.mubr.bf16.gmra.mxu0 %v356
  %v519 = vpop.f32.mrf.mxu0
  %v520 = vadd.f32 %v387, %v519
  %v521 = vpop.f32.mrf.mxu0
  %v522 = vpop.f32.mrf.mxu0
  %v523 = vadd.f32 %v387, %v522
  %v524 = vpop.f32.mrf.mxu0
  %525 = vmatprep.mubr.bf16.mxu0 0
  %526 = vmatmul.mubr.bf16.gmra.mxu0 %v357
  %v527 = vpop.f32.mrf.mxu0
  %v528 = vadd.f32 %v387, %v527
  %v529 = vpop.f32.mrf.mxu0
  %v530 = vpop.f32.mrf.mxu0
  %v531 = vadd.f32 %v387, %v530
  %v532 = vpop.f32.mrf.mxu0
  %533 = vmatprep.mubr.bf16.mxu0 0
  %534 = vmatmul.mubr.bf16.gmra.mxu0 %v358
  %v535 = vpop.f32.mrf.mxu0
  %v536 = vadd.f32 %v387, %v535
  %v537 = vpop.f32.mrf.mxu0
  %v538 = vpop.f32.mrf.mxu0
  %v539 = vadd.f32 %v387, %v538
  %v540 = vpop.f32.mrf.mxu0
  %541 = vmatprep.mubr.bf16.mxu0 0
  %542 = vmatmul.mubr.bf16.gmra.mxu0 %v359
  %v543 = vpop.f32.mrf.mxu0
  %v544 = vadd.f32 %v387, %v543
  %v545 = vpop.f32.mrf.mxu0
  %v546 = vpop.f32.mrf.mxu0
  %v547 = vadd.f32 %v387, %v546
  %v548 = vpop.f32.mrf.mxu0
  %549 = vmatprep.mubr.bf16.mxu0 0
  %550 = vmatmul.mubr.bf16.gmra.mxu0 %v360
  %v551 = vpop.f32.mrf.mxu0
  %v552 = vadd.f32 %v387, %v551
  %v553 = vpop.f32.mrf.mxu0
  %v554 = vpop.f32.mrf.mxu0
  %v555 = vadd.f32 %v387, %v554
  %v556 = vpop.f32.mrf.mxu0
  %557 = vmatprep.mubr.bf16.mxu0 0
  %558 = vmatmul.mubr.bf16.gmra.mxu0 %v361
  %v559 = vpop.f32.mrf.mxu0
  %v560 = vadd.f32 %v387, %v559
  %v561 = vpop.f32.mrf.mxu0
  %v562 = vpop.f32.mrf.mxu0
  %v563 = vadd.f32 %v387, %v562
  %v564 = vpop.f32.mrf.mxu0
  %565 = vmatprep.mubr.bf16.mxu0 0
  %566 = vmatmul.mubr.bf16.gmra.mxu0 %v362
  %v567 = vpop.f32.mrf.mxu0
  %v568 = vadd.f32 %v387, %v567
  %v569 = vpop.f32.mrf.mxu0
  %v570 = vpop.f32.mrf.mxu0
  %v571 = vadd.f32 %v387, %v570
  %v572 = vpop.f32.mrf.mxu0
  %573 = vmatprep.mubr.bf16.mxu0 0
  %574 = vmatmul.mubr.bf16.gmra.mxu0 %v363
  %v575 = vpop.f32.mrf.mxu0
  %v576 = vadd.f32 %v387, %v575
  %v577 = vpop.f32.mrf.mxu0
  %v578 = vpop.f32.mrf.mxu0
  %v579 = vadd.f32 %v387, %v578
  %v580 = vpop.f32.mrf.mxu0
  %581 = vmatprep.mubr.bf16.mxu0 0
  %582 = vmatmul.mubr.bf16.gmra.mxu0 %v364
  %v583 = vpop.f32.mrf.mxu0
  %v584 = vadd.f32 %v387, %v583
  %v585 = vpop.f32.mrf.mxu0
  %v586 = vpop.f32.mrf.mxu0
  %v587 = vadd.f32 %v387, %v586
  %v588 = vpop.f32.mrf.mxu0
  %589 = vmatprep.mubr.bf16.mxu0 0
  %590 = vmatmul.mubr.bf16.gmra.mxu0 %v365
  %v591 = vpop.f32.mrf.mxu0
  %v592 = vadd.f32 %v387, %v591
  %v593 = vpop.f32.mrf.mxu0
  %v594 = vpop.f32.mrf.mxu0
  %v595 = vadd.f32 %v387, %v594
  %v596 = vpop.f32.mrf.mxu0
  %597 = vdwg.mxu0
  %v598 = vxor.u32 %v472, 2147483648
  %v599 = vxor.u32 %v475, 2147483648
  %v600 = vxor.u32 %v480, 2147483648
  %v601 = vxor.u32 %v483, 2147483648
  %v602 = vxor.u32 %v488, 2147483648
  %v603 = vxor.u32 %v491, 2147483648
  %v604 = vxor.u32 %v496, 2147483648
  %v605 = vxor.u32 %v499, 2147483648
  %v606 = vxor.u32 %v504, 2147483648
  %v607 = vxor.u32 %v507, 2147483648
  %v608 = vxor.u32 %v512, 2147483648
  %v609 = vxor.u32 %v515, 2147483648
  %v610 = vxor.u32 %v520, 2147483648
  %v611 = vxor.u32 %v523, 2147483648
  %v612 = vxor.u32 %v528, 2147483648
  %v613 = vxor.u32 %v531, 2147483648
  %v614 = vxor.u32 %v536, 2147483648
  %v615 = vxor.u32 %v539, 2147483648
  %v616 = vxor.u32 %v544, 2147483648
  %v617 = vxor.u32 %v547, 2147483648
  %v618 = vxor.u32 %v552, 2147483648
  %v619 = vxor.u32 %v555, 2147483648
  %v620 = vxor.u32 %v560, 2147483648
  %v621 = vxor.u32 %v563, 2147483648
  %v622 = vxor.u32 %v568, 2147483648
  %v623 = vxor.u32 %v571, 2147483648
  %v624 = vxor.u32 %v576, 2147483648
  %v625 = vxor.u32 %v579, 2147483648
  %v626 = vxor.u32 %v584, 2147483648
  %v627 = vxor.u32 %v587, 2147483648
  %v628 = vxor.u32 %v592, 2147483648
  %v629 = vxor.u32 %v595, 2147483648
  %v630 = vmul.f32 %v598, 1.442695
  %v631 = vpow.pop %v630
  %v632 = vmul.f32 %v599, 1.442695
  %v633 = vpow.pop %v632
  %v634 = vmul.f32 %v600, 1.442695
  %v635 = vpow.pop %v634
  %v636 = vmul.f32 %v601, 1.442695
  %v637 = vpow.pop %v636
  %v638 = vmul.f32 %v602, 1.442695
  %v639 = vpow.pop %v638
  %v640 = vmul.f32 %v603, 1.442695
  %v641 = vpow.pop %v640
  %v642 = vmul.f32 %v604, 1.442695
  %v643 = vpow.pop %v642
  %v644 = vmul.f32 %v605, 1.442695
  %v645 = vpow.pop %v644
  %v646 = vmul.f32 %v606, 1.442695
  %v647 = vpow.pop %v646
  %v648 = vmul.f32 %v607, 1.442695
  %v649 = vpow.pop %v648
  %v650 = vmul.f32 %v608, 1.442695
  %v651 = vpow.pop %v650
  %v652 = vmul.f32 %v609, 1.442695
  %v653 = vpow.pop %v652
  %v654 = vmul.f32 %v610, 1.442695
  %v655 = vpow.pop %v654
  %v656 = vmul.f32 %v611, 1.442695
  %v657 = vpow.pop %v656
  %v658 = vmul.f32 %v612, 1.442695
  %v659 = vpow.pop %v658
  %v660 = vmul.f32 %v613, 1.442695
  %v661 = vpow.pop %v660
  %v662 = vmul.f32 %v614, 1.442695
  %v663 = vpow.pop %v662
  %v664 = vmul.f32 %v615, 1.442695
  %v665 = vpow.pop %v664
  %v666 = vmul.f32 %v616, 1.442695
  %v667 = vpow.pop %v666
  %v668 = vmul.f32 %v617, 1.442695
  %v669 = vpow.pop %v668
  %v670 = vmul.f32 %v618, 1.442695
  %v671 = vpow.pop %v670
  %v672 = vmul.f32 %v619, 1.442695
  %v673 = vpow.pop %v672
  %v674 = vmul.f32 %v620, 1.442695
  %v675 = vpow.pop %v674
  %v676 = vmul.f32 %v621, 1.442695
  %v677 = vpow.pop %v676
  %v678 = vmul.f32 %v622, 1.442695
  %v679 = vpow.pop %v678
  %v680 = vmul.f32 %v623, 1.442695
  %v681 = vpow.pop %v680
  %v682 = vmul.f32 %v624, 1.442695
  %v683 = vpow.pop %v682
  %v684 = vmul.f32 %v625, 1.442695
  %v685 = vpow.pop %v684
  %v686 = vmul.f32 %v626, 1.442695
  %v687 = vpow.pop %v686
  %v688 = vmul.f32 %v627, 1.442695
  %v689 = vpow.pop %v688
  %v690 = vmul.f32 %v628, 1.442695
  %v691 = vpow.pop %v690
  %v692 = vmul.f32 %v629, 1.442695
  %v693 = vpow.pop %v692
  %v694 = vadd.f32 %v631, 1.0
  %v695 = vadd.f32 %v633, 1.0
  %v696 = vadd.f32 %v635, 1.0
  %v697 = vadd.f32 %v637, 1.0
  %v698 = vadd.f32 %v639, 1.0
  %v699 = vadd.f32 %v641, 1.0
  %v700 = vadd.f32 %v643, 1.0
  %v701 = vadd.f32 %v645, 1.0
  %v702 = vadd.f32 %v647, 1.0
  %v703 = vadd.f32 %v649, 1.0
  %v704 = vadd.f32 %v651, 1.0
  %v705 = vadd.f32 %v653, 1.0
  %v706 = vadd.f32 %v655, 1.0
  %v707 = vadd.f32 %v657, 1.0
  %v708 = vadd.f32 %v659, 1.0
  %v709 = vadd.f32 %v661, 1.0
  %v710 = vadd.f32 %v663, 1.0
  %v711 = vadd.f32 %v665, 1.0
  %v712 = vadd.f32 %v667, 1.0
  %v713 = vadd.f32 %v669, 1.0
  %v714 = vadd.f32 %v671, 1.0
  %v715 = vadd.f32 %v673, 1.0
  %v716 = vadd.f32 %v675, 1.0
  %v717 = vadd.f32 %v677, 1.0
  %v718 = vadd.f32 %v679, 1.0
  %v719 = vadd.f32 %v681, 1.0
  %v720 = vadd.f32 %v683, 1.0
  %v721 = vadd.f32 %v685, 1.0
  %v722 = vadd.f32 %v687, 1.0
  %v723 = vadd.f32 %v689, 1.0
  %v724 = vadd.f32 %v691, 1.0
  %v725 = vadd.f32 %v693, 1.0
  %v726 = vrcp.pop %v694
  %v727 = vmul.f32 1.0, %v726
  %v728 = vrcp.pop %v695
  %v729 = vmul.f32 1.0, %v728
  %v730 = vrcp.pop %v696
  %v731 = vmul.f32 1.0, %v730
  %v732 = vrcp.pop %v697
  %v733 = vmul.f32 1.0, %v732
  %v734 = vrcp.pop %v698
  %v735 = vmul.f32 1.0, %v734
  %v736 = vrcp.pop %v699
  %v737 = vmul.f32 1.0, %v736
  %v738 = vrcp.pop %v700
  %v739 = vmul.f32 1.0, %v738
  %v740 = vrcp.pop %v701
  %v741 = vmul.f32 1.0, %v740
  %v742 = vrcp.pop %v702
  %v743 = vmul.f32 1.0, %v742
  %v744 = vrcp.pop %v703
  %v745 = vmul.f32 1.0, %v744
  %v746 = vrcp.pop %v704
  %v747 = vmul.f32 1.0, %v746
  %v748 = vrcp.pop %v705
  %v749 = vmul.f32 1.0, %v748
  %v750 = vrcp.pop %v706
  %v751 = vmul.f32 1.0, %v750
  %v752 = vrcp.pop %v707
  %v753 = vmul.f32 1.0, %v752
  %v754 = vrcp.pop %v708
  %v755 = vmul.f32 1.0, %v754
  %v756 = vrcp.pop %v709
  %v757 = vmul.f32 1.0, %v756
  %v758 = vrcp.pop %v710
  %v759 = vmul.f32 1.0, %v758
  %v760 = vrcp.pop %v711
  %v761 = vmul.f32 1.0, %v760
  %v762 = vrcp.pop %v712
  %v763 = vmul.f32 1.0, %v762
  %v764 = vrcp.pop %v713
  %v765 = vmul.f32 1.0, %v764
  %v766 = vrcp.pop %v714
  %v767 = vmul.f32 1.0, %v766
  %v768 = vrcp.pop %v715
  %v769 = vmul.f32 1.0, %v768
  %v770 = vrcp.pop %v716
  %v771 = vmul.f32 1.0, %v770
  %v772 = vrcp.pop %v717
  %v773 = vmul.f32 1.0, %v772
  %v774 = vrcp.pop %v718
  %v775 = vmul.f32 1.0, %v774
  %v776 = vrcp.pop %v719
  %v777 = vmul.f32 1.0, %v776
  %v778 = vrcp.pop %v720
  %v779 = vmul.f32 1.0, %v778
  %v780 = vrcp.pop %v721
  %v781 = vmul.f32 1.0, %v780
  %v782 = vrcp.pop %v722
  %v783 = vmul.f32 1.0, %v782
  %v784 = vrcp.pop %v723
  %v785 = vmul.f32 1.0, %v784
  %v786 = vrcp.pop %v724
  %v787 = vmul.f32 1.0, %v786
  %v788 = vrcp.pop %v725
  %v789 = vmul.f32 1.0, %v788
  %v790 = vpack.c.bf16 %v729, %v727
  %v791 = vpack.c.bf16 %v733, %v731
  %v792 = vpack.c.bf16 %v737, %v735
  %v793 = vpack.c.bf16 %v741, %v739
  %v794 = vpack.c.bf16 %v745, %v743
  %v795 = vpack.c.bf16 %v749, %v747
  %v796 = vpack.c.bf16 %v753, %v751
  %v797 = vpack.c.bf16 %v757, %v755
  %v798 = vpack.c.bf16 %v761, %v759
  %v799 = vpack.c.bf16 %v765, %v763
  %v800 = vpack.c.bf16 %v769, %v767
  %v801 = vpack.c.bf16 %v773, %v771
  %v802 = vpack.c.bf16 %v777, %v775
  %v803 = vpack.c.bf16 %v781, %v779
  %v804 = vpack.c.bf16 %v785, %v783
  %v805 = vpack.c.bf16 %v789, %v787
  %v822 = vunpack.c.l.b16 %v790
  %v823 = vunpack.c.h.b16 %v790
  %v824 = vunpack.c.l.b16 %v791
  %v825 = vunpack.c.h.b16 %v791
  %v826 = vunpack.c.l.b16 %v792
  %v827 = vunpack.c.h.b16 %v792
  %v828 = vunpack.c.l.b16 %v793
  %v829 = vunpack.c.h.b16 %v793
  %v830 = vunpack.c.l.b16 %v794
  %v831 = vunpack.c.h.b16 %v794
  %v832 = vunpack.c.l.b16 %v795
  %v833 = vunpack.c.h.b16 %v795
  %v834 = vunpack.c.l.b16 %v796
  %v835 = vunpack.c.h.b16 %v796
  %v836 = vunpack.c.l.b16 %v797
  %v837 = vunpack.c.h.b16 %v797
  %v838 = vunpack.c.l.b16 %v798
  %v839 = vunpack.c.h.b16 %v798
  %v840 = vunpack.c.l.b16 %v799
  %v841 = vunpack.c.h.b16 %v799
  %v842 = vunpack.c.l.b16 %v800
  %v843 = vunpack.c.h.b16 %v800
  %v844 = vunpack.c.l.b16 %v801
  %v845 = vunpack.c.h.b16 %v801
  %v846 = vunpack.c.l.b16 %v802
  %v847 = vunpack.c.h.b16 %v802
  %v848 = vunpack.c.l.b16 %v803
  %v849 = vunpack.c.h.b16 %v803
  %v850 = vunpack.c.l.b16 %v804
  %v851 = vunpack.c.h.b16 %v804
  %v852 = vunpack.c.l.b16 %v805
  %v853 = vunpack.c.h.b16 %v805
  %v854 = vpack.c.b16 %v822, %v822
  %v855 = vpack.c.b16 %v823, %v823
  %v856 = vpack.c.b16 %v824, %v824
  %v857 = vpack.c.b16 %v825, %v825
  %v858 = vpack.c.b16 %v826, %v826
  %v859 = vpack.c.b16 %v827, %v827
  %v860 = vpack.c.b16 %v828, %v828
  %v861 = vpack.c.b16 %v829, %v829
  %v862 = vpack.c.b16 %v830, %v830
  %v863 = vpack.c.b16 %v831, %v831
  %v864 = vpack.c.b16 %v832, %v832
  %v865 = vpack.c.b16 %v833, %v833
  %v866 = vpack.c.b16 %v834, %v834
  %v867 = vpack.c.b16 %v835, %v835
  %v868 = vpack.c.b16 %v836, %v836
  %v869 = vpack.c.b16 %v837, %v837
  %v870 = vpack.c.b16 %v838, %v838
  %v871 = vpack.c.b16 %v839, %v839
  %v872 = vpack.c.b16 %v840, %v840
  %v873 = vpack.c.b16 %v841, %v841
  %v874 = vpack.c.b16 %v842, %v842
  %v875 = vpack.c.b16 %v843, %v843
  %v876 = vpack.c.b16 %v844, %v844
  %v877 = vpack.c.b16 %v845, %v845
  %v878 = vpack.c.b16 %v846, %v846
  %v879 = vpack.c.b16 %v847, %v847
  %v880 = vpack.c.b16 %v848, %v848
  %v881 = vpack.c.b16 %v849, %v849
  %v882 = vpack.c.b16 %v850, %v850
  %v883 = vpack.c.b16 %v851, %v851
  %v884 = vpack.c.b16 %v852, %v852
  %v885 = vpack.c.b16 %v853, %v853
  %918 = vst [vmem:[%s5] sm:$0xf] %v854
  %919 = vst [vmem:[%s5 + $0x4] sm:$0xf] %v855
  %920 = vst [vmem:[%s5 + $0x8] sm:$0xf] %v856
  %921 = vst [vmem:[%s5 + $0xc] sm:$0xf] %v857
  %922 = vst [vmem:[%s5 + $0x10] sm:$0xf] %v858
  %923 = vst [vmem:[%s5 + $0x14] sm:$0xf] %v859
  %924 = vst [vmem:[%s5 + $0x18] sm:$0xf] %v860
  %925 = vst [vmem:[%s5 + $0x1c] sm:$0xf] %v861
  %926 = vst [vmem:[%s5 + $0x20] sm:$0xf] %v862
  %927 = vst [vmem:[%s5 + $0x24] sm:$0xf] %v863
  %928 = vst [vmem:[%s5 + $0x28] sm:$0xf] %v864
  %929 = vst [vmem:[%s5 + $0x2c] sm:$0xf] %v865
  %930 = vst [vmem:[%s5 + $0x30] sm:$0xf] %v866
  %931 = vst [vmem:[%s5 + $0x34] sm:$0xf] %v867
  %932 = vst [vmem:[%s5 + $0x38] sm:$0xf] %v868
  %933 = vst [vmem:[%s5 + $0x3c] sm:$0xf] %v869
  %934 = vst [vmem:[%s5 + $0x40] sm:$0xf] %v870
  %935 = vst [vmem:[%s5 + $0x44] sm:$0xf] %v871
  %936 = vst [vmem:[%s5 + $0x48] sm:$0xf] %v872
  %937 = vst [vmem:[%s5 + $0x4c] sm:$0xf] %v873
  %938 = vst [vmem:[%s5 + $0x50] sm:$0xf] %v874
  %939 = vst [vmem:[%s5 + $0x54] sm:$0xf] %v875
  %940 = vst [vmem:[%s5 + $0x58] sm:$0xf] %v876
  %941 = vst [vmem:[%s5 + $0x5c] sm:$0xf] %v877
  %942 = vst [vmem:[%s5 + $0x60] sm:$0xf] %v878
  %943 = vst [vmem:[%s5 + $0x64] sm:$0xf] %v879
  %944 = vst [vmem:[%s5 + $0x68] sm:$0xf] %v880
  %945 = vst [vmem:[%s5 + $0x6c] sm:$0xf] %v881
  %946 = vst [vmem:[%s5 + $0x70] sm:$0xf] %v882
  %947 = vst [vmem:[%s5 + $0x74] sm:$0xf] %v883
  %948 = vst [vmem:[%s5 + $0x78] sm:$0xf] %v884
  %949 = vst [vmem:[%s5 + $0x7c] sm:$0xf] %v885
  // Predicated region
  $region22: #{projection_head_forward.1} parent=0 // pred_check
    _
  $region23: #{projection_head_forward.1} parent=0 // pred_check_branch
    %951 = sbr.rel (0) target = $region25
  $region24: #{projection_head_forward.1} parent=0 // pred_region
    _
  $region25: #{projection_head_forward.1} parent=0 // pred_fallthru
    _
  // Predicated region
  $region26: #{projection_head_forward.1} parent=0 // pred_check
    _
  $region27: #{projection_head_forward.1} parent=0 // pred_check_branch
    %953 = sbr.rel (0) target = $region29
  $region28: #{projection_head_forward.1} parent=0 // pred_region
    _
  $region29: #{projection_head_forward.1} parent=0 // pred_fallthru
    _

</llo_original>
